<compile_context>
chip_gen: v5e
topology: v5e:2x2
jax: 0.10.0
libtpu: 0.0.40
codegen_flags: <defaults>
</compile_context>

<pallas_src>
import functools

import jax
import jax.numpy as jnp
from jax import lax
from jax.experimental import pallas as pl
from jax.experimental.pallas import tpu as pltpu


# ----------------------------------------------------------------------------- kernel
def _conv2d_kernel(x_ref, w_ref, b_ref, o_ref):
    """Grid-less single step: the entire conv is one MXU matmul.

    x_ref: (N*H_out, KH*Wp*Cin)    H-direction im2col of the padded activations
    w_ref: (KH*Wp*Cin, W_out*Cout) banded (Toeplitz-along-W) weight slab, lane-dense
    b_ref: (1, W_out*Cout)         bias tiled across W_out
    o_ref: (N*H_out, W_out*Cout)   lane-dense output (last dim = 128 here)
    """
    # Bias folded into the accumulator init via one hoisted broadcast.
    acc = jnp.broadcast_to(b_ref[...], o_ref.shape).astype(jnp.float32)
    acc = acc + jnp.dot(x_ref[...], w_ref[...], preferred_element_type=jnp.float32)
    o_ref[...] = acc.astype(o_ref.dtype)


# ----------------------------------------------------------------------------- glue
def _band_weight(weight_oihw, wp, w_out, dtype):
    """(Cout,Cin,KH,KW) -> banded, K-folded slab (KH*Wp*Cin, W_out*Cout).

    slab[kh*Wp*Cin + p*Cin + ci, w*Cout + co] = weight[co, ci, kh, p - w]
                                                if 0 <= p - w < KW else 0
    """
    cout, cin, kh, kw = weight_oihw.shape
    w_hwio = jnp.transpose(weight_oihw, (2, 3, 1, 0))          # (KH, KW, Cin, Cout)
    wp_i = jnp.arange(wp)[:, None]                             # padded column index
    w_i = jnp.arange(w_out)[None, :]                           # output column index
    kw_i = wp_i - w_i                                          # (Wp, W_out) tap index
    valid = (kw_i >= 0) & (kw_i < kw)
    band = w_hwio[:, jnp.clip(kw_i, 0, kw - 1)]                # (KH, Wp, W_out, Cin, Cout)
    band = jnp.where(valid[None, :, :, None, None], band, 0.0)
    band = band.transpose(0, 1, 3, 2, 4).reshape(kh * wp * cin, w_out * cout)
    return band.astype(dtype)


def _bias_row(bias, cout, w_out, dtype):
    if bias is None:
        return jnp.zeros((1, w_out * cout), dtype=dtype)
    return jnp.tile(bias, w_out).reshape(1, w_out * cout).astype(dtype)


def _im2col_h(x_nchw, padding, kh, h_out):
    """NCHW -> padded NHWC -> (N*H_out, KH*Wp*Cin) H-direction im2col."""
    n, cin, h, w = x_nchw.shape
    hp, wp = h + 2 * padding, w + 2 * padding
    x_nhwc = jnp.transpose(x_nchw, (0, 2, 3, 1))
    x_pad = jnp.pad(x_nhwc, ((0, 0), (padding, padding), (padding, padding), (0, 0)))
    x3 = x_pad.reshape(n, hp, wp * cin)
    x_cat = jnp.concatenate([x3[:, i:i + h_out, :] for i in range(kh)], axis=-1)
    return x_cat.reshape(n * h_out, kh * wp * cin)


def _call_conv_kernel(x_cat, w_flat, bias_row, *, m_rows, lanes):
    k_dim = x_cat.shape[-1]
    flops = 2 * m_rows * k_dim * lanes                     # executed (banded) MACs
    bytes_accessed = 4 * (x_cat.size + w_flat.size + bias_row.size + m_rows * lanes)
    return pl.pallas_call(
        _conv2d_kernel,
        out_shape=jax.ShapeDtypeStruct((m_rows, lanes), x_cat.dtype),
        compiler_params=pltpu.CompilerParams(
            # Let XLA fuse the transpose/pad/concat + banding/tiling glue into the
            # input DMAs of the pallas_call instead of emitting standalone HLOs.
            allow_input_fusion=[True, True, True]),
        cost_estimate=pl.CostEstimate(
            flops=flops, transcendentals=0, bytes_accessed=bytes_accessed),
    )(x_cat, w_flat, bias_row)


# ----------------------------------------------------------------------------- public API
def meta_conv2d_forward(x_nchw, weight_oihw, bias=None, *, stride=1, padding=1,
                        dilation=1, groups=1, out_format="NCHW"):
    """F.conv2d(x, weight, bias, stride, padding, dilation, groups) for the
    synthetic MetaConv2d instance (stride=1, dilation=1, groups=1).

    x_nchw:      (N, Cin, H, W)      float32
    weight_oihw: (Cout, Cin, KH, KW) float32
    bias:        (Cout,) or None
    returns:     (N, Cout, H_out, W_out) float32 NCHW (PyTorch semantics), or
                 NHWC if out_format="NHWC" (keeps the lane-dense layout and skips
                 the standalone output transpose for layout-agnostic consumers).
    """
    assert stride in (1, (1, 1)) and dilation in (1, (1, 1)) and groups == 1, (
        "this synthetic MetaConv2d instance uses stride=1, dilation=1, groups=1")
    n, cin, h, w = x_nchw.shape
    cout, cin_w, kh, kw = weight_oihw.shape
    assert cin == cin_w
    hp, wp = h + 2 * padding, w + 2 * padding
    h_out, w_out = hp - kh + 1, wp - kw + 1

    x_cat = _im2col_h(x_nchw, padding, kh, h_out)
    w_flat = _band_weight(weight_oihw, wp, w_out, x_nchw.dtype)
    bias_row = _bias_row(bias, cout, w_out, x_nchw.dtype)

    out2 = _call_conv_kernel(x_cat, w_flat, bias_row,
                             m_rows=n * h_out, lanes=w_out * cout)
    out_nhwc = out2.reshape(n, h_out, w_out, cout)
    if out_format == "NHWC":
        return out_nhwc
    return jnp.transpose(out_nhwc, (0, 3, 1, 2))          # NCHW, like PyTorch


def make_meta_conv2d(weight_oihw, bias=None, *, padding=1, input_hw, out_format="NCHW"):
    """Precompute (cache) the banded weight slab + tiled bias once, return a jitted
    forward over x only — avoids re-running the weight-glue chain every call."""
    cout, cin, kh, kw = weight_oihw.shape
    h, w = input_hw
    hp, wp = h + 2 * padding, w + 2 * padding
    h_out, w_out = hp - kh + 1, wp - kw + 1
    w_flat = jax.device_put(_band_weight(weight_oihw, wp, w_out, weight_oihw.dtype))
    bias_row = jax.device_put(_bias_row(bias, cout, w_out, weight_oihw.dtype))

    @jax.jit
    def apply(x_nchw):
        n = x_nchw.shape[0]
        x_cat = _im2col_h(x_nchw, padding, kh, h_out)
        out2 = _call_conv_kernel(x_cat, w_flat, bias_row,
                                 m_rows=n * h_out, lanes=w_out * cout)
        out_nhwc = out2.reshape(n, h_out, w_out, cout)
        if out_format == "NHWC":
            return out_nhwc
        return jnp.transpose(out_nhwc, (0, 3, 1, 2))

    return apply


# ----------------------------------------------------------------------------- demo / check
if __name__ == "__main__":
    # Module config: MetaConv2d(4, 8, kernel_size=3, stride=1, padding=1, bias=True)
    N, CIN, H, W = 2, 4, 16, 16
    COUT, KH, KW = 8, 3, 3

    key = jax.random.PRNGKey(0)
    kx, kw_, kb = jax.random.split(key, 3)
    x = jax.random.normal(kx, (N, CIN, H, W), dtype=jnp.float32)
    # Deterministic param init (shapes match nn.Conv2d(4, 8, 3, padding=1)).
    fan_in = CIN * KH * KW
    bound = 1.0 / (fan_in ** 0.5)
    weight = jax.random.uniform(kw_, (COUT, CIN, KH, KW), jnp.float32, -bound, bound)
    bias = jax.random.uniform(kb, (COUT,), jnp.float32, -bound, bound)

    # Path 1: plain F.conv2d-style forward (weight glue fused into the pallas_call).
    fwd = jax.jit(functools.partial(meta_conv2d_forward, stride=1, padding=1))
    out = jax.block_until_ready(fwd(x, weight, bias))

    # Path 2: cached-weight forward (banding precomputed once, reused every call).
    conv_apply = make_meta_conv2d(weight, bias, padding=1, input_hw=(H, W))
    out_cached = jax.block_until_ready(conv_apply(x))

    # Correctness check against XLA's conv (same semantics as F.conv2d).
    ref = lax.conv_general_dilated(
        x, weight, window_strides=(1, 1), padding=((1, 1), (1, 1)),
        dimension_numbers=("NCHW", "OIHW", "NCHW"))
    ref = ref + bias.reshape(1, COUT, 1, 1)
    assert out.shape == (N, COUT, H, W)
    assert jnp.allclose(out, ref, atol=1e-4, rtol=1e-4), \
        float(jnp.max(jnp.abs(out - ref)))
    assert jnp.allclose(out_cached, ref, atol=1e-4, rtol=1e-4), \
        float(jnp.max(jnp.abs(out_cached - ref)))

    print("KERNEL_OK")
</pallas_src>

<mosaic_0001>
module attributes {stable_mosaic.version = 11 : i64} {
  func.func @_conv2d_kernel(%arg0: memref<32x216xf32, #tpu.memory_space<vmem>>, %arg1: memref<216x128xf32, #tpu.memory_space<vmem>>, %arg2: memref<1x128xf32, #tpu.memory_space<vmem>>, %arg3: memref<32x128xf32, #tpu.memory_space<vmem>>) attributes {dimension_semantics = [], scalar_prefetch = 0 : i64, scratch_operands = 0 : i64, tpu.core_type = #tpu.core_type<tc>} {
    %c0 = arith.constant 0 : index
    %c0_0 = arith.constant 0 : index
    %0 = vector.load %arg2[%c0, %c0_0] : memref<1x128xf32, #tpu.memory_space<vmem>>, vector<1x128xf32>
    %1 = vector.shape_cast %0 : vector<1x128xf32> to vector<1x128xf32>
    %2 = vector.broadcast %1 : vector<1x128xf32> to vector<32x128xf32>
    %c0_1 = arith.constant 0 : index
    %c0_2 = arith.constant 0 : index
    %3 = vector.load %arg0[%c0_1, %c0_2] : memref<32x216xf32, #tpu.memory_space<vmem>>, vector<32x216xf32>
    %c0_3 = arith.constant 0 : index
    %c0_4 = arith.constant 0 : index
    %4 = vector.load %arg1[%c0_3, %c0_4] : memref<216x128xf32, #tpu.memory_space<vmem>>, vector<216x128xf32>
    %cst = arith.constant dense<0.000000e+00> : vector<32x128xf32>
    %5 = tpu.matmul %3, %4, %cst {dimension_numbers = #tpu.dot_dimension_numbers<[1], [0], [0], [1], [0, 0, 1, 1], [], []>} : vector<32x216xf32>, vector<216x128xf32>, vector<32x128xf32> -> vector<32x128xf32>
    %6 = arith.addf %2, %5 : vector<32x128xf32>
    %c0_5 = arith.constant 0 : index
    %c0_6 = arith.constant 0 : index
    %7 = vector.load %arg3[%c0_5, %c0_6] : memref<32x128xf32, #tpu.memory_space<vmem>>, vector<32x128xf32>
    tpu.vector_store %arg3[%c0_5, %c0_6], %6 {strides = array<i32>} : memref<32x128xf32, #tpu.memory_space<vmem>>, vector<32x128xf32>,
    return
  }
}

</mosaic_0001>

<llo_original>
// kernel: tile.8
$region0: #{tile.8}
  #allocation0 [shape = 's32[1]{0}', space=sflag, size = 0x4, scoped, tag = 'scoped memory for tile.8']
  %s0 = inlined_call_operand.vmem [shape: f32[8], index: 0, kind: input, shape index: {}]
  %s1 = inlined_call_operand.vmem [shape: f32[16,8], index: 1, kind: output, shape index: {}]
  // Predicated region
  $region2: #{tile.8} parent=0 // pred_check
    _
  $region3: #{tile.8} parent=0 // pred_check_branch
    %3 = sbr.rel (0) target = $region5
  $region4: #{tile.8} parent=0 // pred_region
    _
  $region5: #{tile.8} parent=0 // pred_fallthru
    _
  %v4 = vld [vmem:[%s0] ss:$0 sm:$0xff]
  %5 = vst [vmem:[%s1] sm:$0xff] %v4
  %s6 = scalar_lea.vmem %s1, 8
  %7 = vst [vmem:[%s6] sm:$0xff] %v4

// kernel: tile.9
$region0: #{tile.9}
  %s0 = inlined_call_operand.vmem [shape: f32[16,8], index: 0, kind: input, shape index: {}]
  %s1 = inlined_call_operand.vmem [shape: f32[1,128], index: 1, kind: output, shape index: {}]
  $region1: #{tile.9} parent=0
    #allocation0 [shape = 'u8[4096]{0}', space=vmem, size = 0x1000, scoped, tag = 'scoped mem for output reshape']
    %v2 = vld [vmem:[%s0] sm:$0x1]
    %vm3 = vcmask 64512
    %4 = vst.msk [vmem:[#allocation0] sm:$0x1] %vm3, %v2
    %s5 = scalar_lea.vmem %s0, 15
    %v6 = vld [vmem:[%s5] sm:$0x1]
    %7 = vrot.lane.b32.xlu0 %v6, 120
    %v8 = vpop.permute.xlu0 %7
    %vm9 = vcmask 1048512
    %10 = vst.msk [vmem:[#allocation0] sm:$0x1] %vm9, %v8
    %s11 = scalar_lea.vmem %s0, 14
    %v12 = vld [vmem:[%s11] sm:$0x1]
    %13 = vrot.lane.b32.xlu0 %v12, 112
    %v14 = vpop.permute.xlu0 %13
    %vm15 = vcmask 982912
    %16 = vst.msk [vmem:[#allocation0] sm:$0x1] %vm15, %v14
    %s17 = scalar_lea.vmem %s0, 13
    %v18 = vld [vmem:[%s17] sm:$0x1]
    %19 = vrot.lane.b32.xlu0 %v18, 104
    %v20 = vpop.permute.xlu0 %19
    %vm21 = vcmask 917312
    %22 = vst.msk [vmem:[#allocation0] sm:$0x1] %vm21, %v20
    %s23 = scalar_lea.vmem %s0, 12
    %v24 = vld [vmem:[%s23] sm:$0x1]
    %25 = vrot.lane.b32.xlu0 %v24, 96
    %v26 = vpop.permute.xlu0 %25
    %vm27 = vcmask 851712
    %28 = vst.msk [vmem:[#allocation0] sm:$0x1] %vm27, %v26
    %s29 = scalar_lea.vmem %s0, 11
    %v30 = vld [vmem:[%s29] sm:$0x1]
    %31 = vrot.lane.b32.xlu0 %v30, 88
    %v32 = vpop.permute.xlu0 %31
    %vm33 = vcmask 786112
    %34 = vst.msk [vmem:[#allocation0] sm:$0x1] %vm33, %v32
    %s35 = scalar_lea.vmem %s0, 10
    %v36 = vld [vmem:[%s35] sm:$0x1]
    %37 = vrot.lane.b32.xlu0 %v36, 80
    %v38 = vpop.permute.xlu0 %37
    %vm39 = vcmask 720512
    %40 = vst.msk [vmem:[#allocation0] sm:$0x1] %vm39, %v38
    %s41 = scalar_lea.vmem %s0, 9
    %v42 = vld [vmem:[%s41] sm:$0x1]
    %43 = vrot.lane.b32.xlu0 %v42, 72
    %v44 = vpop.permute.xlu0 %43
    %vm45 = vcmask 654912
    %46 = vst.msk [vmem:[#allocation0] sm:$0x1] %vm45, %v44
    %s47 = scalar_lea.vmem %s0, 8
    %v48 = vld [vmem:[%s47] sm:$0x1]
    %49 = vrot.lane.b32.xlu0 %v48, 64
    %v50 = vpop.permute.xlu0 %49
    %vm51 = vcmask 589312
    %52 = vst.msk [vmem:[#allocation0] sm:$0x1] %vm51, %v50
    %s53 = scalar_lea.vmem %s0, 7
    %v54 = vld [vmem:[%s53] sm:$0x1]
    %55 = vrot.lane.b32.xlu0 %v54, 56
    %v56 = vpop.permute.xlu0 %55
    %vm57 = vcmask 523712
    %58 = vst.msk [vmem:[#allocation0] sm:$0x1] %vm57, %v56
    %s59 = scalar_lea.vmem %s0, 6
    %v60 = vld [vmem:[%s59] sm:$0x1]
    %61 = vrot.lane.b32.xlu0 %v60, 48
    %v62 = vpop.permute.xlu0 %61
    %vm63 = vcmask 458112
    %64 = vst.msk [vmem:[#allocation0] sm:$0x1] %vm63, %v62
    %s65 = scalar_lea.vmem %s0, 5
    %v66 = vld [vmem:[%s65] sm:$0x1]
    %67 = vrot.lane.b32.xlu0 %v66, 40
    %v68 = vpop.permute.xlu0 %67
    %vm69 = vcmask 392512
    %70 = vst.msk [vmem:[#allocation0] sm:$0x1] %vm69, %v68
    %s71 = scalar_lea.vmem %s0, 4
    %v72 = vld [vmem:[%s71] sm:$0x1]
    %73 = vrot.lane.b32.xlu0 %v72, 32
    %v74 = vpop.permute.xlu0 %73
    %vm75 = vcmask 326912
    %76 = vst.msk [vmem:[#allocation0] sm:$0x1] %vm75, %v74
    %s77 = scalar_lea.vmem %s0, 3
    %v78 = vld [vmem:[%s77] sm:$0x1]
    %79 = vrot.lane.b32.xlu0 %v78, 24
    %v80 = vpop.permute.xlu0 %79
    %vm81 = vcmask 261312
    %82 = vst.msk [vmem:[#allocation0] sm:$0x1] %vm81, %v80
    %s83 = scalar_lea.vmem %s0, 2
    %v84 = vld [vmem:[%s83] sm:$0x1]
    %85 = vrot.lane.b32.xlu0 %v84, 16
    %v86 = vpop.permute.xlu0 %85
    %vm87 = vcmask 195712
    %88 = vst.msk [vmem:[#allocation0] sm:$0x1] %vm87, %v86
    %s89 = scalar_lea.vmem %s0, 1
    %v90 = vld [vmem:[%s89] sm:$0x1]
    %91 = vrot.lane.b32.xlu0 %v90, 8
    %v92 = vpop.permute.xlu0 %91
    %vm93 = vcmask 130112
    %94 = vst.msk [vmem:[#allocation0] sm:$0x1] %vm93, %v92
    %s96 = ssub.s32 2, 1
    %v97 = vld [vmem:[#allocation0] sm:%s96]
    %s99 = ssub.s32 2, 1
    %100 = vst [vmem:[%s1] sm:%s99] %v97

// kernel: meta_conv2d_forward.1
$region0: #{meta_conv2d_forward.1}
  #allocation0 [shape = 'u32[]', space=smem, size = 0x4, offset = 0x4, fixed_abs, tag = 'smem constant byte address 0x4 - core index']
  #allocation1 [shape = 'u32[72,128]{1,0:T(1,128)}', space=vmem, size = 0x9000, scoped, tag = 'internal scratch']
  %s0 = inlined_call_operand.vmem [shape: f32[32,216], index: 0, kind: input, shape index: {}]
  %s1 = inlined_call_operand.vmem [shape: f32[216,128], index: 1, kind: input, shape index: {}]
  %s2 = inlined_call_operand.vmem [shape: f32[1,128], index: 2, kind: input, shape index: {}]
  %s3 = inlined_call_operand.vmem [shape: f32[32,128], index: 3, kind: output, shape index: {}]
  %s4 = sld [smem:[#allocation0]]
  $region22: #{meta_conv2d_forward.1} parent=0
    _
  %s6 = ssub.s32 1, %s4
  %s7 = scalar_select 0, %s6, %s4
  // Predicated region
  $region2: #{meta_conv2d_forward.1} parent=0 // pred_check
    _
  $region3: #{meta_conv2d_forward.1} parent=0 // pred_check_branch
    %9 = sbr.rel (0) target = $region5
  $region4: #{meta_conv2d_forward.1} parent=0 // pred_region
    _
  $region5: #{meta_conv2d_forward.1} parent=0 // pred_fallthru
    _
  // Predicated region
  $region6: #{meta_conv2d_forward.1} parent=0 // pred_check
    _
  $region7: #{meta_conv2d_forward.1} parent=0 // pred_check_branch
    %11 = sbr.rel (0) target = $region9
  $region8: #{meta_conv2d_forward.1} parent=0 // pred_region
    _
  $region9: #{meta_conv2d_forward.1} parent=0 // pred_fallthru
    _
  // Predicated region
  $region10: #{meta_conv2d_forward.1} parent=0 // pred_check
    _
  $region11: #{meta_conv2d_forward.1} parent=0 // pred_check_branch
    %13 = sbr.rel (0) target = $region13
  $region12: #{meta_conv2d_forward.1} parent=0 // pred_region
    _
  $region13: #{meta_conv2d_forward.1} parent=0 // pred_fallthru
    _
  %v14 = vld [vmem:[%s2] sm:$0x1]
  %v16 = vperm.slane %v14, 0
  %v18 = vld [vmem:[%s0] sm:$0xff]
  %v19 = vld [vmem:[%s0 + $0x8] sm:$0xff]
  %v20 = vld [vmem:[%s0 + $0x10] sm:$0xff]
  %v21 = vld [vmem:[%s0 + $0x18] sm:$0xff]
  %v22 = vld [vmem:[%s0 + $0x20] sm:$0xff]
  %v23 = vld [vmem:[%s0 + $0x28] sm:$0xff]
  %v24 = vld [vmem:[%s0 + $0x30] sm:$0xff]
  %v25 = vld [vmem:[%s0 + $0x38] sm:$0xff]
  %v26 = vld [vmem:[%s1] sm:$0xff]
  %v27 = vld [vmem:[%s1 + $0x8] sm:$0xff]
  %v28 = vld [vmem:[%s1 + $0x10] sm:$0xff]
  %v29 = vld [vmem:[%s1 + $0x18] sm:$0xff]
  %v30 = vld [vmem:[%s1 + $0x20] sm:$0xff]
  %v31 = vld [vmem:[%s1 + $0x28] sm:$0xff]
  %v32 = vld [vmem:[%s1 + $0x30] sm:$0xff]
  %v33 = vld [vmem:[%s1 + $0x38] sm:$0xff]
  %v34 = vld [vmem:[%s1 + $0x40] sm:$0xff]
  %v35 = vld [vmem:[%s1 + $0x48] sm:$0xff]
  %v36 = vld [vmem:[%s1 + $0x50] sm:$0xff]
  %v37 = vld [vmem:[%s1 + $0x58] sm:$0xff]
  %v38 = vld [vmem:[%s1 + $0x60] sm:$0xff]
  %v39 = vld [vmem:[%s1 + $0x68] sm:$0xff]
  %v40 = vld [vmem:[%s1 + $0x70] sm:$0xff]
  %v41 = vld [vmem:[%s1 + $0x78] sm:$0xff]
  %v42 = vld [vmem:[%s1 + $0x80] sm:$0xff]
  %v43 = vld [vmem:[%s1 + $0x88] sm:$0xff]
  %v44 = vld [vmem:[%s1 + $0x90] sm:$0xff]
  %v45 = vld [vmem:[%s1 + $0x98] sm:$0xff]
  %v46 = vld [vmem:[%s1 + $0xa0] sm:$0xff]
  %v47 = vld [vmem:[%s1 + $0xa8] sm:$0xff]
  %v48 = vld [vmem:[%s1 + $0xb0] sm:$0xff]
  %v49 = vld [vmem:[%s1 + $0xb8] sm:$0xff]
  %v50 = vld [vmem:[%s1 + $0xc0] sm:$0xff]
  %v51 = vld [vmem:[%s1 + $0xc8] sm:$0xff]
  %v52 = vld [vmem:[%s1 + $0xd0] sm:$0xff]
  %vm53 = vcmask 719872
  %v55 = vsel %vm53, %v19, 0
  %v58 = vsel %vm53, %v21, 0
  %v61 = vsel %vm53, %v23, 0
  %v64 = vsel %vm53, %v25, 0
  %66 = vmatpush.msra.mxu0 %v41
  %67 = vmatpush.msra.mxu0 %v40
  %68 = vmatpush.msra.mxu0 %v39
  %69 = vmatpush.msra.mxu0 %v38
  %70 = vmatpush.msra.mxu0 %v37
  %71 = vmatpush.msra.mxu0 %v36
  %72 = vmatpush.msra.mxu0 %v35
  %73 = vmatpush.msra.mxu0 %v34
  %74 = vmatpush.msra.mxu0 %v33
  %75 = vmatpush.msra.mxu0 %v32
  %76 = vmatpush.msra.mxu0 %v31
  %77 = vmatpush.msra.mxu0 %v30
  %78 = vmatpush.msra.mxu0 %v29
  %79 = vmatpush.msra.mxu0 %v28
  %80 = vmatpush.msra.mxu0 %v27
  %81 = vmatpush.msra.mxu0 %v26
  %82 = vmatmul.f32.gmra.mxu0 %v18
  %v83 = vpop.f32.mrf.mxu0
  %v84 = vadd.f32 0.0, %v83
  %85 = vmatmul.f32.gmra.mxu0 %v20
  %v86 = vpop.f32.mrf.mxu0
  %v87 = vadd.f32 0.0, %v86
  %88 = vmatmul.f32.gmra.mxu0 %v22
  %v89 = vpop.f32.mrf.mxu0
  %v90 = vadd.f32 0.0, %v89
  %91 = vmatmul.f32.gmra.mxu0 %v24
  %v92 = vpop.f32.mrf.mxu0
  %v93 = vadd.f32 0.0, %v92
  %94 = vdwg.mxu0
  %95 = vmatpush.msra.mxu0 0.0
  %96 = vmatpush.msra.mxu0 0.0
  %97 = vmatpush.msra.mxu0 0.0
  %98 = vmatpush.msra.mxu0 0.0
  %99 = vmatpush.msra.mxu0 0.0
  %100 = vmatpush.msra.mxu0 %v52
  %101 = vmatpush.msra.mxu0 %v51
  %102 = vmatpush.msra.mxu0 %v50
  %103 = vmatpush.msra.mxu0 %v49
  %104 = vmatpush.msra.mxu0 %v48
  %105 = vmatpush.msra.mxu0 %v47
  %106 = vmatpush.msra.mxu0 %v46
  %107 = vmatpush.msra.mxu0 %v45
  %108 = vmatpush.msra.mxu0 %v44
  %109 = vmatpush.msra.mxu0 %v43
  %110 = vmatpush.msra.mxu0 %v42
  %111 = vmatmul.f32.gmra.mxu0 %v55
  %v112 = vpop.f32.mrf.mxu0
  %v113 = vadd.f32 %v84, %v112
  %114 = vmatmul.f32.gmra.mxu0 %v58
  %v115 = vpop.f32.mrf.mxu0
  %v116 = vadd.f32 %v87, %v115
  %117 = vmatmul.f32.gmra.mxu0 %v61
  %v118 = vpop.f32.mrf.mxu0
  %v119 = vadd.f32 %v90, %v118
  %120 = vmatmul.f32.gmra.mxu0 %v64
  %v121 = vpop.f32.mrf.mxu0
  %v122 = vadd.f32 %v93, %v121
  %123 = vdwg.mxu0
  %v124 = vadd.f32 %v16, %v113
  %v125 = vadd.f32 %v16, %v116
  %v126 = vadd.f32 %v16, %v119
  %v127 = vadd.f32 %v16, %v122
  %128 = vst [vmem:[%s3] sm:$0xff] %v124
  %129 = vst [vmem:[%s3 + $0x8] sm:$0xff] %v125
  %130 = vst [vmem:[%s3 + $0x10] sm:$0xff] %v126
  %131 = vst [vmem:[%s3 + $0x18] sm:$0xff] %v127
  // Predicated region
  $region14: #{meta_conv2d_forward.1} parent=0 // pred_check
    _
  $region15: #{meta_conv2d_forward.1} parent=0 // pred_check_branch
    %133 = sbr.rel (0) target = $region17
  $region16: #{meta_conv2d_forward.1} parent=0 // pred_region
    _
  $region17: #{meta_conv2d_forward.1} parent=0 // pred_fallthru
    _
  // Predicated region
  $region18: #{meta_conv2d_forward.1} parent=0 // pred_check
    _
  $region19: #{meta_conv2d_forward.1} parent=0 // pred_check_branch
    %135 = sbr.rel (0) target = $region21
  $region20: #{meta_conv2d_forward.1} parent=0 // pred_region
    _
  $region21: #{meta_conv2d_forward.1} parent=0 // pred_fallthru
    _

</llo_original>
